<compile_context>
chip_gen: v7x
topology: tpu7x:2x2x1
jax: 0.10.0
libtpu: 0.0.40
codegen_flags: <defaults>
</compile_context>

<pallas_src>
import jax
import jax.numpy as jnp
from jax.experimental import pallas as pl
from jax.experimental.pallas import tpu as pltpu


def _round_up(n: int, m: int) -> int:
    return ((n + m - 1) // m) * m


# --------------------------------------------------------------------------- #
# Kernel
# --------------------------------------------------------------------------- #
def _make_kernel(dout_p: int, tk: int):
    """Kernel factory; padded out_features (split point) and K tile are static."""

    def kernel(x_ref, rhs_ref, b_ref, noise_ref, out_ref, acc_ref, s_ref):
        # x_ref    : (TB, Din_p)          full rows of x, resident across k
        # rhs_ref  : (TK, Dout_p+Din_p)   K-slab of the fused [W.T | V]
        # b_ref    : (1, Dout_p)   f32    bias row (grid-constant)
        # noise_ref: (TB, Dout_p)  f32    eps @ chol(U).T (precomputed in wrapper)
        # acc_ref  : (TB, Dout_p)  f32    mean accumulator
        # s_ref    : (TB, 1)       f32    diag(x V x^T) accumulator
        k = pl.program_id(1)

        @pl.when(k == 0)
        def _init():
            acc_ref[...] = jnp.zeros_like(acc_ref)
            s_ref[...] = jnp.zeros_like(s_ref)

        # K-slab LHS sliced from the resident x block (start is 128-aligned).
        xk = x_ref[:, pl.ds(pl.multiple_of(k * tk, 128), tk)]
        # One fused, lane-dense MXU op per K step: [mean_k | (x@V)_k]
        res = jnp.dot(xk, rhs_ref[...], preferred_element_type=jnp.float32)
        acc_ref[...] += res[:, :dout_p]
        # Fold the x@V partial into the scalar s immediately (no full-width carry).
        s_ref[...] += jnp.sum(res[:, dout_p:] * x_ref[...].astype(jnp.float32),
                              axis=-1, keepdims=True)

        @pl.when(k == pl.num_programs(1) - 1)
        def _finalize():
            mean = acc_ref[...] + b_ref[...]
            s = jnp.maximum(s_ref[...], 0.0)          # guard sqrt vs FP rounding
            out_ref[...] = (mean + jnp.sqrt(s) * noise_ref[...]).astype(out_ref.dtype)

    return kernel


# --------------------------------------------------------------------------- #
# Per-layer constant preparation (done ONCE at parameter setup)
# --------------------------------------------------------------------------- #
def prepare_laplace_linear(weight, bias, U, V, *, compute_dtype=jnp.bfloat16):
    """Precompute per-layer constants: chol(U), padded fused [W.T | V], bias row."""
    weight = jnp.asarray(weight, jnp.float32)
    U = jnp.asarray(U, jnp.float32)
    V = jnp.asarray(V, jnp.float32)
    dout, din = weight.shape
    din_p, dout_p = _round_up(din, 128), _round_up(dout, 128)

    def pad2(a, r, c):
        return jnp.pad(a, ((0, r - a.shape[0]), (0, c - a.shape[1])))

    rhs_cat = jnp.concatenate(                               # (Din_p, Dout_p + Din_p)
        [pad2(weight.T, din_p, dout_p), pad2(V, din_p, din_p)],
        axis=1).astype(compute_dtype)
    lt_t = jnp.linalg.cholesky(U).T                          # (Dout, Dout) f32
    b_row = jnp.zeros((1, dout_p), jnp.float32)
    if bias is not None:
        b_row = b_row.at[0, :dout].set(jnp.asarray(bias, jnp.float32))

    return dict(rhs_cat=rhs_cat, lt_t=lt_t, b_row=b_row,
                din=din, dout=dout, din_p=din_p, dout_p=dout_p,
                compute_dtype=jnp.dtype(compute_dtype))


# --------------------------------------------------------------------------- #
# Tiling (generation / VMEM aware)
# --------------------------------------------------------------------------- #
def _pick_batch_tile(batch: int, cap: int = 256) -> int:
    b16 = _round_up(batch, 16)              # 16-row alignment (bf16 sublane packing)
    tb = 16
    for cand in (256, 128, 64, 32, 16):
        if cand > cap:
            continue
        if _round_up(b16, cand) - b16 <= max(b16 // 8, 0):   # limit padded-row waste
            tb = cand
            break
    # Ensure the "parallel" batch axis has >= 2 tiles so v7x's 2nd TC has work.
    if _round_up(b16, tb) // tb < 2 and b16 >= 32:
        tb = _round_up((b16 + 1) // 2, 16)
    return tb


def _vmem_bytes(tb, tk, din_p, dout_p, bc, bo):
    ncat = dout_p + din_p
    return (2 * tb * din_p * bc            # x rows (double-buffered)
            + 2 * tk * ncat * bc           # [W.T | V] K-slab (double-buffered)
            + 2 * dout_p * 4               # bias row
            + 2 * tb * dout_p * 4          # noise (f32)
            + 2 * tb * dout_p * bo         # output
            + tb * dout_p * 4              # mean accumulator scratch
            + tb * 128 * 4                 # s accumulator scratch (lane-padded)
            + tb * ncat * 4)               # transient per-step dot result


def _select_tiles(batch, din_p, dout_p, bc, bo):
    try:
        vmem_cap = int(pltpu.get_tpu_info().vmem_capacity_bytes)
    except Exception:
        vmem_cap = 64 << 20                 # conservative fallback (v7x)
    budget = int(vmem_cap * 0.7)

    tb = _pick_batch_tile(batch)
    # TK must exactly divide Din_p (Din_p is a multiple of 128, so 128 always works).
    tk_cands = [t for t in (2048, 1024, 512, 256, 128)
                if t <= din_p and din_p % t == 0] or [din_p]
    while True:
        for tk in tk_cands:                 # largest divisor of Din_p that fits VMEM
            est = _vmem_bytes(tb, tk, din_p, dout_p, bc, bo)
            if est <= budget:
                limit = min(vmem_cap, max(int(est * 1.4) + (4 << 20), 32 << 20))
                return tb, tk, limit
        if tb > 16:
            tb = max(16, tb // 2)
        else:
            # Minimal config; clamp to physical VMEM.  For extreme Din+Dout an
            # additional N-tile over the rhs_cat columns would be the next step.
            tk = tk_cands[-1]
            est = _vmem_bytes(tb, tk, din_p, dout_p, bc, bo)
            return tb, tk, min(vmem_cap, max(est, 32 << 20))


# --------------------------------------------------------------------------- #
# Forward (eval-mode sample).  Training mode is just x @ W.T + b.
# --------------------------------------------------------------------------- #
def laplace_linear_sample(params, x, eps):
    """One MultivariateNormal(mean, s_b * U) sample per row of x.

    x:   (B, Din)   eps: (B, Dout) standard-normal draws.
    """
    x = jnp.asarray(x)
    eps = jnp.asarray(eps)
    B, din = x.shape
    dout, din_p, dout_p = params["dout"], params["din_p"], params["dout_p"]
    assert din == params["din"] and eps.shape == (B, dout)
    cdt = params["compute_dtype"]
    out_dtype = x.dtype
    ncat = dout_p + din_p

    tb, tk, vmem_limit = _select_tiles(
        B, din_p, dout_p, jnp.dtype(cdt).itemsize, jnp.dtype(out_dtype).itemsize)
    b_p = _round_up(_round_up(B, 16), tb)
    nb, nk = b_p // tb, din_p // tk

    def pad2(a, r, c):
        return jnp.pad(a, ((0, r - a.shape[0]), (0, c - a.shape[1])))

    x_p = pad2(x.astype(jnp.float32), b_p, din_p).astype(cdt)
    # Hoisted noise GEMM: eps @ chol(U).T as one XLA GEMM (keeps the
    # (Dout_p, Dout_p) factor out of VMEM; overlaps with the pallas_call).
    noise_p = pad2(eps.astype(jnp.float32) @ params["lt_t"], b_p, dout_p)

    out_p = pl.pallas_call(
        _make_kernel(dout_p, tk),
        out_shape=jax.ShapeDtypeStruct((b_p, dout_p), out_dtype),
        grid_spec=pltpu.PrefetchScalarGridSpec(
            num_scalar_prefetch=0,
            grid=(nb, nk),
            in_specs=[
                pl.BlockSpec((tb, din_p), lambda i, k: (i, 0)),    # x rows (resident over k)
                pl.BlockSpec((tk, ncat), lambda i, k: (k, 0)),     # [W.T | V] K-slab
                pl.BlockSpec((1, dout_p), lambda i, k: (0, 0)),    # bias row (grid-constant)
                pl.BlockSpec((tb, dout_p), lambda i, k: (i, 0)),   # precomputed noise
            ],
            out_specs=pl.BlockSpec((tb, dout_p), lambda i, k: (i, 0)),
            scratch_shapes=[pltpu.VMEM((tb, dout_p), jnp.float32),  # mean accumulator
                            pltpu.VMEM((tb, 1), jnp.float32)],      # s accumulator
        ),
        compiler_params=pltpu.CompilerParams(
            dimension_semantics=("parallel", "arbitrary"),          # batch across TCs (v7x)
            vmem_limit_bytes=vmem_limit),
    )(x_p, params["rhs_cat"], params["b_row"], noise_p)

    return out_p[:B, :dout]


# --------------------------------------------------------------------------- #
# Demo / correctness gate
# --------------------------------------------------------------------------- #
if __name__ == "__main__":
    def reference(x, weight, bias, U, V, eps):
        mean = x @ weight.T + bias
        s = jnp.maximum(jnp.sum((x @ V) * x, axis=-1, keepdims=True), 0.0)
        return mean + jnp.sqrt(s) * (eps @ jnp.linalg.cholesky(U).T)

    def make_case(key, B, Din, Dout):
        k1, k2, k3, k4, k5, k6 = jax.random.split(key, 6)
        x = jax.random.normal(k1, (B, Din), jnp.float32)
        weight = 0.1 * jax.random.normal(k2, (Dout, Din), jnp.float32)
        bias = 0.1 * jax.random.normal(k3, (Dout,), jnp.float32)
        A = 0.1 * jax.random.normal(k4, (Dout, Dout), jnp.float32)
        U = A @ A.T + 1e-3 * jnp.eye(Dout, dtype=jnp.float32)
        C = 0.1 * jax.random.normal(k5, (Din, Din), jnp.float32)
        V = C @ C.T + 1e-3 * jnp.eye(Din, dtype=jnp.float32)
        eps = jax.random.normal(k6, (B, Dout), jnp.float32)
        return x, weight, bias, U, V, eps

    key = jax.random.PRNGKey(0)
    k0, k1 = jax.random.split(key)

    # Case 1: small layer (B=8, Din=32, Dout=16) — single K step.
    x, w, b, U, V, eps = make_case(k0, 8, 32, 16)
    ref = reference(x, w, b, U, V, eps)

    p_f32 = prepare_laplace_linear(w, b, U, V, compute_dtype=jnp.float32)
    out_f32 = jax.block_until_ready(laplace_linear_sample(p_f32, x, eps))
    assert out_f32.shape == ref.shape
    assert jnp.allclose(out_f32, ref, atol=1e-4, rtol=1e-4), "case1 f32 mismatch"

    p_bf16 = prepare_laplace_linear(w, b, U, V)       # bf16 compute, f32 accumulation
    out_bf16 = jax.block_until_ready(laplace_linear_sample(p_bf16, x, eps))
    assert jnp.allclose(out_bf16, ref, atol=1e-1, rtol=1e-1), "case1 bf16 mismatch"

    # Case 2: exercises multi-K accumulation (Din=300 -> Din_p=384, TK=128, nk=3)
    # and the 2-tile parallel batch split (B=20 -> TB=16, nb=2).
    x2, w2, b2, U2, V2, eps2 = make_case(k1, 20, 300, 70)
    ref2 = reference(x2, w2, b2, U2, V2, eps2)
    p2 = prepare_laplace_linear(w2, b2, U2, V2, compute_dtype=jnp.float32)
    out2 = jax.block_until_ready(laplace_linear_sample(p2, x2, eps2))
    assert out2.shape == ref2.shape
    assert jnp.allclose(out2, ref2, atol=1e-2, rtol=1e-2), "case2 f32 mismatch"

    print("KERNEL_OK")
</pallas_src>

<mosaic_0001>
module attributes {stable_mosaic.version = 11 : i64} {
  func.func @kernel(%arg0: i32, %arg1: i32, %arg2: memref<16x128xf32, #tpu.memory_space<vmem>>, %arg3: memref<128x256xf32, #tpu.memory_space<vmem>>, %arg4: memref<1x128xf32, #tpu.memory_space<vmem>>, %arg5: memref<16x128xf32, #tpu.memory_space<vmem>>, %arg6: memref<16x128xf32, #tpu.memory_space<vmem>>, %arg7: memref<16x128xf32, #tpu.memory_space<vmem>>, %arg8: memref<16x1xf32, #tpu.memory_space<vmem>>) attributes {dimension_semantics = [#tpu.dimension_semantics<parallel>, #tpu.dimension_semantics<arbitrary>], iteration_bounds = array<i64: 1, 1>, scalar_prefetch = 0 : i64, scratch_operands = 2 : i64, tpu.core_type = #tpu.core_type<tc>, window_params = [{transform_indices = @transform_0, window_bounds = array<i64: 16, 128>}, {transform_indices = @transform_1, window_bounds = array<i64: 128, 256>}, {pipeline_mode = #tpu.pipeline_mode<synchronous>, transform_indices = @transform_2, window_bounds = array<i64: 1, 128>}, {transform_indices = @transform_3, window_bounds = array<i64: 16, 128>}, {transform_indices = @transform_4, window_bounds = array<i64: 16, 128>}]} {
    %c0_i32 = arith.constant 0 : i32
    %0 = arith.cmpi eq, %arg1, %c0_i32 : i32
    %1 = arith.extui %0 : i1 to i32
    %c0_i32_0 = arith.constant 0 : i32
    %2 = arith.cmpi ne, %1, %c0_i32_0 : i32
    scf.if %2 {
      %cst_16 = arith.constant 0.000000e+00 : f32
      %24 = vector.broadcast %cst_16 : f32 to vector<16x128xf32>
      %c0_17 = arith.constant 0 : index
      %c0_18 = arith.constant 0 : index
      %25 = vector.load %arg7[%c0_17, %c0_18] : memref<16x128xf32, #tpu.memory_space<vmem>>, vector<16x128xf32>
      tpu.vector_store %arg7[%c0_17, %c0_18], %24 {strides = array<i32>} : memref<16x128xf32, #tpu.memory_space<vmem>>, vector<16x128xf32>,
      %cst_19 = arith.constant 0.000000e+00 : f32
      %26 = vector.broadcast %cst_19 : f32 to vector<16x1xf32>
      %c0_20 = arith.constant 0 : index
      %c0_21 = arith.constant 0 : index
      %27 = vector.load %arg8[%c0_20, %c0_21] : memref<16x1xf32, #tpu.memory_space<vmem>>, vector<16x1xf32>
      tpu.vector_store %arg8[%c0_20, %c0_21], %26 {strides = array<i32>} : memref<16x1xf32, #tpu.memory_space<vmem>>, vector<16x1xf32>,
    } else {
    }
    %c128_i32 = arith.constant 128 : i32
    %3 = arith.muli %arg1, %c128_i32 : i32
    %4 = tpu.assume_multiple %3, 128 : i32
    %c0 = arith.constant 0 : index
    %5 = arith.index_cast %4 : i32 to index
    %6 = vector.load %arg2[%c0, %5] : memref<16x128xf32, #tpu.memory_space<vmem>>, vector<16x128xf32>
    %c0_1 = arith.constant 0 : index
    %c0_2 = arith.constant 0 : index
    %7 = vector.load %arg3[%c0_1, %c0_2] : memref<128x256xf32, #tpu.memory_space<vmem>>, vector<128x256xf32>
    %cst = arith.constant dense<0.000000e+00> : vector<16x256xf32>
    %8 = tpu.matmul %6, %7, %cst {dimension_numbers = #tpu.dot_dimension_numbers<[1], [0], [0], [1], [0, 0, 1, 1], [], []>} : vector<16x128xf32>, vector<128x256xf32>, vector<16x256xf32> -> vector<16x256xf32>
    %c0_3 = arith.constant 0 : index
    %c0_4 = arith.constant 0 : index
    %9 = vector.load %arg7[%c0_3, %c0_4] : memref<16x128xf32, #tpu.memory_space<vmem>>, vector<16x128xf32>
    %10 = vector.extract_strided_slice %8 {offsets = [0, 0], sizes = [16, 128], strides = [1, 1]} : vector<16x256xf32> to vector<16x128xf32>
    %11 = arith.addf %9, %10 : vector<16x128xf32>
    %c0_5 = arith.constant 0 : index
    %c0_6 = arith.constant 0 : index
    %12 = vector.load %arg7[%c0_5, %c0_6] : memref<16x128xf32, #tpu.memory_space<vmem>>, vector<16x128xf32>
    tpu.vector_store %arg7[%c0_5, %c0_6], %11 {strides = array<i32>} : memref<16x128xf32, #tpu.memory_space<vmem>>, vector<16x128xf32>,
    %c0_7 = arith.constant 0 : index
    %c0_8 = arith.constant 0 : index
    %13 = vector.load %arg8[%c0_7, %c0_8] : memref<16x1xf32, #tpu.memory_space<vmem>>, vector<16x1xf32>
    %14 = vector.extract_strided_slice %8 {offsets = [0, 128], sizes = [16, 128], strides = [1, 1]} : vector<16x256xf32> to vector<16x128xf32>
    %c0_9 = arith.constant 0 : index
    %c0_10 = arith.constant 0 : index
    %15 = vector.load %arg2[%c0_9, %c0_10] : memref<16x128xf32, #tpu.memory_space<vmem>>, vector<16x128xf32>
    %16 = arith.mulf %14, %15 : vector<16x128xf32>
    %cst_11 = arith.constant dense<0.000000e+00> : vector<16xf32>
    %17 = vector.multi_reduction <add>, %16, %cst_11 [1] : vector<16x128xf32> to vector<16xf32>
    %18 = vector.shape_cast %17 : vector<16xf32> to vector<16x1xf32>
    %19 = arith.addf %13, %18 : vector<16x1xf32>
    %c0_12 = arith.constant 0 : index
    %c0_13 = arith.constant 0 : index
    %20 = vector.load %arg8[%c0_12, %c0_13] : memref<16x1xf32, #tpu.memory_space<vmem>>, vector<16x1xf32>
    tpu.vector_store %arg8[%c0_12, %c0_13], %19 {strides = array<i32>} : memref<16x1xf32, #tpu.memory_space<vmem>>, vector<16x1xf32>,
    %c0_i32_14 = arith.constant 0 : i32
    %21 = arith.cmpi eq, %arg1, %c0_i32_14 : i32
    %22 = arith.extui %21 : i1 to i32
    %c0_i32_15 = arith.constant 0 : i32
    %23 = arith.cmpi ne, %22, %c0_i32_15 : i32
    scf.if %23 {
      %c0_16 = arith.constant 0 : index
      %c0_17 = arith.constant 0 : index
      %24 = vector.load %arg7[%c0_16, %c0_17] : memref<16x128xf32, #tpu.memory_space<vmem>>, vector<16x128xf32>
      %c0_18 = arith.constant 0 : index
      %c0_19 = arith.constant 0 : index
      %25 = vector.load %arg4[%c0_18, %c0_19] : memref<1x128xf32, #tpu.memory_space<vmem>>, vector<1x128xf32>
      %26 = vector.broadcast %25 : vector<1x128xf32> to vector<16x128xf32>
      %27 = arith.addf %24, %26 : vector<16x128xf32>
      %c0_20 = arith.constant 0 : index
      %c0_21 = arith.constant 0 : index
      %28 = vector.load %arg8[%c0_20, %c0_21] : memref<16x1xf32, #tpu.memory_space<vmem>>, vector<16x1xf32>
      %cst_22 = arith.constant 0.000000e+00 : f32
      %29 = vector.broadcast %cst_22 : f32 to vector<16x1xf32>
      %30 = arith.maximumf %28, %29 : vector<16x1xf32>
      %31 = math.sqrt %30 : vector<16x1xf32>
      %c0_23 = arith.constant 0 : index
      %c0_24 = arith.constant 0 : index
      %32 = vector.load %arg5[%c0_23, %c0_24] : memref<16x128xf32, #tpu.memory_space<vmem>>, vector<16x128xf32>
      %33 = vector.broadcast %31 : vector<16x1xf32> to vector<16x128xf32>
      %34 = arith.mulf %33, %32 : vector<16x128xf32>
      %35 = arith.addf %27, %34 : vector<16x128xf32>
      %c0_25 = arith.constant 0 : index
      %c0_26 = arith.constant 0 : index
      %36 = vector.load %arg6[%c0_25, %c0_26] : memref<16x128xf32, #tpu.memory_space<vmem>>, vector<16x128xf32>
      tpu.vector_store %arg6[%c0_25, %c0_26], %35 {strides = array<i32>} : memref<16x128xf32, #tpu.memory_space<vmem>>, vector<16x128xf32>,
    } else {
    }
    return
  }
  func.func @transform_0(%arg0: i32, %arg1: i32) -> (i32, i32) {
    %c0_i32 = arith.constant 0 : i32
    %c0_i32_0 = arith.constant 0 : i32
    return %arg0, %c0_i32 : i32, i32
  }
  func.func @transform_1(%arg0: i32, %arg1: i32) -> (i32, i32) {
    %c0_i32 = arith.constant 0 : i32
    %c0_i32_0 = arith.constant 0 : i32
    return %arg1, %c0_i32 : i32, i32
  }
  func.func @transform_2(%arg0: i32, %arg1: i32) -> (i32, i32) {
    %c0_i32 = arith.constant 0 : i32
    %c0_i32_0 = arith.constant 0 : i32
    %c0_i32_1 = arith.constant 0 : i32
    return %c0_i32, %c0_i32_0 : i32, i32
  }
  func.func @transform_3(%arg0: i32, %arg1: i32) -> (i32, i32) {
    %c0_i32 = arith.constant 0 : i32
    %c0_i32_0 = arith.constant 0 : i32
    return %arg0, %c0_i32 : i32, i32
  }
  func.func @transform_4(%arg0: i32, %arg1: i32) -> (i32, i32) {
    %c0_i32 = arith.constant 0 : i32
    %c0_i32_0 = arith.constant 0 : i32
    return %arg0, %c0_i32 : i32, i32
  }
}

</mosaic_0001>

<llo_original>
// kernel: tpu_custom_call.1
$region0: #{tpu_custom_call.1}
  #allocation0 [shape = 'u32[]', space=smem, size = 0x4, offset = 0x4, fixed_abs, tag = 'smem constant byte address 0x4 - core index']
  #allocation1 [shape = 'u32[144,128]{1,0:T(1,128)}', space=vmem, size = 0x12000, scoped, tag = 'internal scratch']
  #allocation2 [shape = 'f32[16,128]{1,0:T(8,128)}', space=vmem, size = 0x2000, scoped, tag = 'scratch operand']
  #allocation3 [shape = 'f32[16,1]{1,0:T(8,128)}', space=vmem, size = 0x2000, scoped, tag = 'scratch operand']
  %s0 = inlined_call_operand.hbm [shape: f32[16,128], index: 0, kind: input, shape index: {}]
  %s1 = inlined_call_operand.hbm [shape: f32[128,256], index: 1, kind: input, shape index: {}]
  %s2 = inlined_call_operand.vmem [shape: f32[1,128], index: 2, kind: input, shape index: {}]
  %s3 = inlined_call_operand.hbm [shape: f32[16,128], index: 3, kind: input, shape index: {}]
  %s4 = inlined_call_operand.hbm [shape: f32[16,128], index: 4, kind: output, shape index: {}]
  %s5 = sld [smem:[#allocation0]]
  $region46: #{tpu_custom_call.1} parent=0
    _
  %s7 = ssub.s32 1, %s5
  %s8 = scalar_select 0, %s7, %s5
  $region1: #{tpu_custom_call.1} parent=0
    #allocation4 [shape = 'u8[8192]{0}', space=vmem, size = 0x2000, scoped, tag = 'input window, operand 0, single buffered']
    #allocation5 [shape = 's32[1]{0}', space=sflag, size = 0x4, scoped, tag = 'scoped memory for tpu_custom_call.1']
    #allocation6 [shape = 's32[1]{0}', space=sflag, size = 0x4, scoped, tag = 'scoped memory for tpu_custom_call.1']
    #allocation7 [shape = 'u8[131072]{0}', space=vmem, size = 0x20000, scoped, tag = 'input window, operand 1, single buffered']
    #allocation8 [shape = 's32[1]{0}', space=sflag, size = 0x4, scoped, tag = 'scoped memory for tpu_custom_call.1']
    #allocation9 [shape = 'u8[8192]{0}', space=vmem, size = 0x2000, scoped, tag = 'input window, operand 3, single buffered']
    #allocation10 [shape = 'u8[8192]{0}', space=vmem, size = 0x2000, scoped, tag = 'output window, operand 0, single buffered']
    %9 = vsyncpa [#allocation5], 0
    %10 = vsyncpa [#allocation8], 0
    %11 = vsyncpa [#allocation6], 0
    // Predicated region
    $region2: #{tpu_custom_call.1} parent=1 // pred_check
      _
    $region3: #{tpu_custom_call.1} parent=1 // pred_check_branch
      %13 = sbr.rel (0) target = $region5
    $region4: #{tpu_custom_call.1} parent=1 // pred_region
      %s15 = ssub.s32 256, 256
      %16 = vsyncadd [#allocation5], %s15
      %s17 = sshll.u32 [#allocation4], 4
      %s18 = int_to_ptr.vmem [resolvable:$true] %s17
      %23 = dma.hbm_to_vmem [thread:$0]  %s0, 256, %s18, [#allocation5], 128, 128, 8
    $region5: #{tpu_custom_call.1} parent=1 // pred_fallthru
      _
    // Predicated region
    $region6: #{tpu_custom_call.1} parent=1 // pred_check
      _
    $region7: #{tpu_custom_call.1} parent=1 // pred_check_branch
      %25 = sbr.rel (0) target = $region9
    $region8: #{tpu_custom_call.1} parent=1 // pred_region
      %s27 = ssub.s32 4096, 4096
      %28 = vsyncadd [#allocation8], %s27
      %s29 = sshll.u32 [#allocation7], 4
      %s30 = int_to_ptr.vmem [resolvable:$true] %s29
      %35 = dma.hbm_to_vmem [thread:$0]  %s1, 4096, %s30, [#allocation8], 256, 256, 16
    $region9: #{tpu_custom_call.1} parent=1 // pred_fallthru
      _
    // Predicated region
    $region10: #{tpu_custom_call.1} parent=1 // pred_check
      _
    $region11: #{tpu_custom_call.1} parent=1 // pred_check_branch
      %37 = sbr.rel (0) target = $region13
    $region12: #{tpu_custom_call.1} parent=1 // pred_region
      _
    $region13: #{tpu_custom_call.1} parent=1 // pred_fallthru
      _
    // Predicated region
    $region14: #{tpu_custom_call.1} parent=1 // pred_check
      _
    $region15: #{tpu_custom_call.1} parent=1 // pred_check_branch
      %39 = sbr.rel (0) target = $region17
    $region16: #{tpu_custom_call.1} parent=1 // pred_region
      %s41 = ssub.s32 256, 256
      %42 = vsyncadd [#allocation8], %s41
      %s43 = sshll.u32 [#allocation9], 4
      %s44 = int_to_ptr.vmem [resolvable:$true] %s43
      %49 = dma.hbm_to_vmem [thread:$0]  %s3, 256, %s44, [#allocation8], 128, 128, 8
    $region17: #{tpu_custom_call.1} parent=1 // pred_fallthru
      _
    // Predicated region
    $region18: #{tpu_custom_call.1} parent=1 // pred_check
      _
    $region19: #{tpu_custom_call.1} parent=1 // pred_check_branch
      %51 = sbr.rel (0) target = $region21
    $region20: #{tpu_custom_call.1} parent=1 // pred_region
      %52 = dma.done [#allocation5], 256
    $region21: #{tpu_custom_call.1} parent=1 // pred_fallthru
      _
    // Predicated region
    $region22: #{tpu_custom_call.1} parent=1 // pred_check
      _
    $region23: #{tpu_custom_call.1} parent=1 // pred_check_branch
      %54 = sbr.rel (0) target = $region25
    $region24: #{tpu_custom_call.1} parent=1 // pred_region
      %55 = dma.done [#allocation8], 4096
    $region25: #{tpu_custom_call.1} parent=1 // pred_fallthru
      _
    // Predicated region
    $region26: #{tpu_custom_call.1} parent=1 // pred_check
      _
    $region27: #{tpu_custom_call.1} parent=1 // pred_check_branch
      %57 = sbr.rel (0) target = $region29
    $region28: #{tpu_custom_call.1} parent=1 // pred_region
      %58 = dma.done [#allocation8], 256
    $region29: #{tpu_custom_call.1} parent=1 // pred_fallthru
      _
    %p59 = scmp.eq.s32.totalorder 0, 0
    // Predicated region
    $region30: #{tpu_custom_call.1} parent=1 // pred_check
      %p60 = pneg %p59
    $region31: #{tpu_custom_call.1} parent=1 // pred_check_branch
      %62 = sbr.rel (%p60) target = $region33
    $region32: #{tpu_custom_call.1} parent=1 // pred_region
      %63 = vst [vmem:[#allocation2] sm:$0xff] 0.0
      %64 = vst [vmem:[#allocation2 + $0x8] sm:$0xff] 0.0
      %vm65 = vcmask 7168
      %66 = vst.msk [vmem:[#allocation3] sm:$0xff] %vm65, 0.0
      %67 = vst.msk [vmem:[#allocation3 + $0x8] sm:$0xff] %vm65, 0.0
    $region33: #{tpu_custom_call.1} parent=1 // pred_fallthru
      _
    %s68 = smul.u32 0, 128
    %s69 = sshra.s32 %s68, 7
    %s70 = sand.u32 %s68, 127
    %s71 = scalar_lea.vmem [#allocation4], %s69
    %v72 = vld [vmem:[%s71] sm:$0xff]
    %v73 = vld [vmem:[%s71 + $0x8] sm:$0xff]
    %v74 = vld [vmem:[#allocation7] sm:$0xff]
    %v75 = vld [vmem:[#allocation7 + $0x8] sm:$0xff]
    %v76 = vld [vmem:[#allocation7 + $0x10] sm:$0xff]
    %v77 = vld [vmem:[#allocation7 + $0x18] sm:$0xff]
    %v78 = vld [vmem:[#allocation7 + $0x20] sm:$0xff]
    %v79 = vld [vmem:[#allocation7 + $0x28] sm:$0xff]
    %v80 = vld [vmem:[#allocation7 + $0x30] sm:$0xff]
    %v81 = vld [vmem:[#allocation7 + $0x38] sm:$0xff]
    %v82 = vld [vmem:[#allocation7 + $0x40] sm:$0xff]
    %v83 = vld [vmem:[#allocation7 + $0x48] sm:$0xff]
    %v84 = vld [vmem:[#allocation7 + $0x50] sm:$0xff]
    %v85 = vld [vmem:[#allocation7 + $0x58] sm:$0xff]
    %v86 = vld [vmem:[#allocation7 + $0x60] sm:$0xff]
    %v87 = vld [vmem:[#allocation7 + $0x68] sm:$0xff]
    %v88 = vld [vmem:[#allocation7 + $0x70] sm:$0xff]
    %v89 = vld [vmem:[#allocation7 + $0x78] sm:$0xff]
    %v90 = vld [vmem:[#allocation7 + $0x80] sm:$0xff]
    %v91 = vld [vmem:[#allocation7 + $0x88] sm:$0xff]
    %v92 = vld [vmem:[#allocation7 + $0x90] sm:$0xff]
    %v93 = vld [vmem:[#allocation7 + $0x98] sm:$0xff]
    %v94 = vld [vmem:[#allocation7 + $0xa0] sm:$0xff]
    %v95 = vld [vmem:[#allocation7 + $0xa8] sm:$0xff]
    %v96 = vld [vmem:[#allocation7 + $0xb0] sm:$0xff]
    %v97 = vld [vmem:[#allocation7 + $0xb8] sm:$0xff]
    %v98 = vld [vmem:[#allocation7 + $0xc0] sm:$0xff]
    %v99 = vld [vmem:[#allocation7 + $0xc8] sm:$0xff]
    %v100 = vld [vmem:[#allocation7 + $0xd0] sm:$0xff]
    %v101 = vld [vmem:[#allocation7 + $0xd8] sm:$0xff]
    %v102 = vld [vmem:[#allocation7 + $0xe0] sm:$0xff]
    %v103 = vld [vmem:[#allocation7 + $0xe8] sm:$0xff]
    %v104 = vld [vmem:[#allocation7 + $0xf0] sm:$0xff]
    %v105 = vld [vmem:[#allocation7 + $0xf8] sm:$0xff]
    %106 = vmatprep.subr.mxu0 %v75
    %107 = vmatpush1.msra.mxu0 %v74
    %108 = vmatprep.subr.mxu0 %v77
    %109 = vmatpush1.msra.mxu0 %v76
    %110 = vmatprep.subr.mxu0 %v79
    %111 = vmatpush1.msra.mxu0 %v78
    %112 = vmatprep.subr.mxu0 %v81
    %113 = vmatpush1.msra.mxu0 %v80
    %114 = vmatprep.subr.mxu0 %v83
    %115 = vmatpush1.msra.mxu0 %v82
    %116 = vmatprep.subr.mxu0 %v85
    %117 = vmatpush1.msra.mxu0 %v84
    %118 = vmatprep.subr.mxu0 %v87
    %119 = vmatpush1.msra.mxu0 %v86
    %120 = vmatprep.subr.mxu0 %v89
    %121 = vmatpush1.msra.mxu0 %v88
    %122 = vmatprep.subr.mxu0 %v91
    %123 = vmatpush1.msra.mxu0 %v90
    %124 = vmatprep.subr.mxu0 %v93
    %125 = vmatpush1.msra.mxu0 %v92
    %126 = vmatprep.subr.mxu0 %v95
    %127 = vmatpush1.msra.mxu0 %v94
    %128 = vmatprep.subr.mxu0 %v97
    %129 = vmatpush1.msra.mxu0 %v96
    %130 = vmatprep.subr.mxu0 %v99
    %131 = vmatpush1.msra.mxu0 %v98
    %132 = vmatprep.subr.mxu0 %v101
    %133 = vmatpush1.msra.mxu0 %v100
    %134 = vmatprep.subr.mxu0 %v103
    %135 = vmatpush1.msra.mxu0 %v102
    %136 = vmatprep.subr.mxu0 %v105
    %137 = vmatpush1.msra.mxu0 %v104
    %138 = vmatprep.subr.mxu0 0.0
    %139 = vmatpush1.msra.mxu0 0.0
    %140 = vmatprep.subr.mxu0 0.0
    %141 = vmatpush1.msra.mxu0 0.0
    %142 = vmatprep.subr.mxu0 0.0
    %143 = vmatpush1.msra.mxu0 0.0
    %144 = vmatprep.subr.mxu0 0.0
    %145 = vmatpush1.msra.mxu0 0.0
    %146 = vmatprep.subr.mxu0 0.0
    %147 = vmatpush1.msra.mxu0 0.0
    %148 = vmatprep.subr.mxu0 0.0
    %149 = vmatpush1.msra.mxu0 0.0
    %150 = vmatprep.subr.mxu0 0.0
    %151 = vmatpush1.msra.mxu0 0.0
    %152 = vmatprep.subr.mxu0 0.0
    %153 = vmatpush1.msra.mxu0 0.0
    %154 = vmatprep.subr.mxu0 0.0
    %155 = vmatpush1.msra.mxu0 0.0
    %156 = vmatprep.subr.mxu0 0.0
    %157 = vmatpush1.msra.mxu0 0.0
    %158 = vmatprep.subr.mxu0 0.0
    %159 = vmatpush1.msra.mxu0 0.0
    %160 = vmatprep.subr.mxu0 0.0
    %161 = vmatpush1.msra.mxu0 0.0
    %162 = vmatprep.subr.mxu0 0.0
    %163 = vmatpush1.msra.mxu0 0.0
    %164 = vmatprep.subr.mxu0 0.0
    %165 = vmatpush1.msra.mxu0 0.0
    %166 = vmatprep.subr.mxu0 0.0
    %167 = vmatpush1.msra.mxu0 0.0
    %168 = vmatprep.subr.mxu0 0.0
    %169 = vmatpush1.msra.mxu0 0.0
    %170 = vmatprep.mubr.f32.mxu0 0.0
    %171 = vmatmul.mubr.f32.gmra.mrb[0].mxu0 %v72
    %v172 = vpop.f32.mrb[0].mxu0
    %v173 = vadd.f32 0.0, %v172
    %v174 = vpop.f32.mrb[0].mxu0
    %v175 = vadd.f32 0.0, %v174
    %176 = vmatprep.mubr.f32.mxu0 0.0
    %177 = vmatmul.mubr.f32.gmra.mrb[0].mxu0 %v73
    %v178 = vpop.f32.mrb[0].mxu0
    %v179 = vadd.f32 0.0, %v178
    %v180 = vpop.f32.mrb[0].mxu0
    %v181 = vadd.f32 0.0, %v180
    %182 = vdwg.mxu0
    %v183 = vld [vmem:[#allocation2] sm:$0xff]
    %v184 = vld [vmem:[#allocation2 + $0x8] sm:$0xff]
    %v185 = vadd.f32 %v183, %v173
    %v186 = vadd.f32 %v184, %v179
    %187 = vst [vmem:[#allocation2] sm:$0xff] %v185
    %188 = vst [vmem:[#allocation2 + $0x8] sm:$0xff] %v186
    %v189 = vld [vmem:[#allocation3] sm:$0xff]
    %v190 = vld [vmem:[#allocation3 + $0x8] sm:$0xff]
    %v191 = vld [vmem:[#allocation4] sm:$0xff]
    %v192 = vld [vmem:[#allocation4 + $0x8] sm:$0xff]
    %v193 = vmul.f32 %v175, %v191
    %v194 = vmul.f32 %v181, %v192
    %195 = vadd.xlane.f32.xlu0 %v193
    %v196 = vpop.xlane.xlu0 %195
    %197 = vadd.xlane.f32.xlu0 %v194
    %v198 = vpop.xlane.xlu0 %197
    %v199 = vadd.f32 %v189, %v196
    %v200 = vadd.f32 %v190, %v198
    %vm201 = vcmask 7168
    %202 = vst.msk [vmem:[#allocation3] sm:$0xff] %vm201, %v199
    %203 = vst.msk [vmem:[#allocation3 + $0x8] sm:$0xff] %vm201, %v200
    // Predicated region
    $region34: #{tpu_custom_call.1} parent=1 // pred_check
      %p204 = pneg %p59
    $region35: #{tpu_custom_call.1} parent=1 // pred_check_branch
      %206 = sbr.rel (%p204) target = $region37
    $region36: #{tpu_custom_call.1} parent=1 // pred_region
      %v207 = vld [vmem:[#allocation2] sm:$0xff]
      %v208 = vld [vmem:[#allocation2 + $0x8] sm:$0xff]
      %v209 = vld [vmem:[%s2] sm:$0x1]
      %v211 = vlaneseq
      %v212 = vshrl.u32 %v211, 7
      %v213 = vsub.s32 0, %v212
      %v214 = vrot.slane %v209, %v213
      %v216 = vadd.f32 %v207, %v214
      %v217 = vadd.f32 %v208, %v214
      %v218 = vld [vmem:[#allocation3] sm:$0xff]
      %v219 = vld [vmem:[#allocation3 + $0x8] sm:$0xff]
      %v220 = vmax.f32 %v218, 0.0
      %v221 = vmax.f32 %v219, 0.0
      %v222 = vrsqrt.pop %v220
      %v223 = vmul.f32 %v220, %v222
      %vm224 = vcmp.eq.f32.partialorder %v220, inf
      %v225 = vsel %vm224, %v220, %v223
      %vm226 = vcmp.eq.f32.partialorder %v220, 0.0
      %v227 = vand.u32 %v220, 2147483648
      %v228 = vsel %vm226, %v227, %v225
      %v229 = vrsqrt.pop %v221
      %v230 = vmul.f32 %v221, %v229
      %vm231 = vcmp.eq.f32.partialorder %v221, inf
      %v232 = vsel %vm231, %v221, %v230
      %vm233 = vcmp.eq.f32.partialorder %v221, 0.0
      %v234 = vand.u32 %v221, 2147483648
      %v235 = vsel %vm233, %v234, %v232
      %v236 = vld [vmem:[#allocation9] sm:$0xff]
      %v237 = vld [vmem:[#allocation9 + $0x8] sm:$0xff]
      %239 = vset.pattern.permute.xlu0 0
      %240 = vperm.xlu0 %239, %v228
      %v241 = vpop.permute.xlu0 %240
      %244 = vset.pattern.permute.xlu0 0
      %245 = vperm.xlu0 %244, %v235
      %v246 = vpop.permute.xlu0 %245
      %v248 = vmul.f32 %v241, %v236
      %v249 = vmul.f32 %v246, %v237
      %v250 = vadd.f32 %v216, %v248
      %v251 = vadd.f32 %v217, %v249
      %252 = vst [vmem:[#allocation10] sm:$0xff] %v250
      %253 = vst [vmem:[#allocation10 + $0x8] sm:$0xff] %v251
    $region37: #{tpu_custom_call.1} parent=1 // pred_fallthru
      _
    // Predicated region
    $region38: #{tpu_custom_call.1} parent=1 // pred_check
      _
    $region39: #{tpu_custom_call.1} parent=1 // pred_check_branch
      %255 = sbr.rel (0) target = $region41
    $region40: #{tpu_custom_call.1} parent=1 // pred_region
      %s257 = ssub.s32 256, 256
      %258 = vsyncadd [#allocation6], %s257
      %s259 = sshll.u32 [#allocation10], 4
      %s260 = int_to_ptr.vmem [resolvable:$true] %s259
      %265 = dma.vmem_to_hbm [thread:$0]  %s260, 256, %s4, [#allocation6], 128, 128, 8
    $region41: #{tpu_custom_call.1} parent=1 // pred_fallthru
      _
    // Predicated region
    $region42: #{tpu_custom_call.1} parent=1 // pred_check
      _
    $region43: #{tpu_custom_call.1} parent=1 // pred_check_branch
      %267 = sbr.rel (0) target = $region45
    $region44: #{tpu_custom_call.1} parent=1 // pred_region
      %268 = dma.done [#allocation6], 256
    $region45: #{tpu_custom_call.1} parent=1 // pred_fallthru
      _
    %269 = vsyncpa [#allocation5], 1
    %270 = vsyncpa [#allocation8], 1
    %271 = vsyncpa [#allocation6], 1

</llo_original>
